<compile_context>
chip_gen: v6e
topology: v6e:2x2x1
jax: 0.10.0
libtpu: 0.0.40
codegen_flags: <defaults>
</compile_context>

<pallas_src>
import functools

import jax
import jax.numpy as jnp
from jax.experimental import pallas as pl
from jax.experimental.pallas import tpu as pltpu


# ----------------------------------------------------------------------------
# Kernels
# ----------------------------------------------------------------------------
def _pose_kernel(x_ref, w_ref, b_ref, o_ref, *, compute_dtype):
    """One batch tile: for each batch row b, y[:, b*D:(b+1)*D] = x[b].T @ W + bias.

    x_ref: (tb, F, T) native layout block; o_ref: (T, tb*D) lane-packed block
    (column slab b*D:(b+1)*D holds batch row b -> free reshape to (T, tb, D)).
    """
    tb = x_ref.shape[0]
    d = w_ref.shape[1]
    w = w_ref[...]
    bias = b_ref[...]                                   # (1, D) float32
    for bb in range(tb):                                # static unroll, tb <= 16
        xb = x_ref[bb]                                  # (F, T)
        if compute_dtype is not None:
            xb = xb.astype(compute_dtype)               # VMEM-local cast only
        y = jnp.dot(xb.T, w, preferred_element_type=jnp.float32) + bias  # (T, D)
        o_ref[:, bb * d:(bb + 1) * d] = y.astype(o_ref.dtype)


def _rotvel_kernel(x_ref, wp_ref, bp_ref, wv_ref, bv_ref, o_ref, *,
                   compute_dtype):
    """rot_vel batch tile: velEmbedding for every frame, poseEmbedding for
    frame 0 (tiny M=1 matmul per row), merged with a row-0 select."""
    tb = x_ref.shape[0]
    t = x_ref.shape[2]
    d = wv_ref.shape[1]
    wp = wp_ref[...]
    wv = wv_ref[...]
    bp = bp_ref[...]                                    # (1, D) float32
    bv = bv_ref[...]                                    # (1, D) float32
    row = jax.lax.broadcasted_iota(jnp.int32, (t, 1), 0)
    for bb in range(tb):
        xb = x_ref[bb]                                  # (F, T)
        if compute_dtype is not None:
            xb = xb.astype(compute_dtype)
        xt = xb.T                                       # (T, F)
        yv = jnp.dot(xt, wv, preferred_element_type=jnp.float32) + bv     # (T, D)
        yp = jnp.dot(xt[0:1, :], wp, preferred_element_type=jnp.float32) + bp
        y = jnp.where(row == 0, yp, yv)                 # frame 0 -> pose
        o_ref[:, bb * d:(bb + 1) * d] = y.astype(o_ref.dtype)


# ----------------------------------------------------------------------------
# Tiling helpers
# ----------------------------------------------------------------------------
_VMEM_LIMIT_BYTES = 32 * 1024 * 1024     # raise v5e's 16 MiB default; = v6e/v7x


def _round_up(v, m):
    return ((int(v) + m - 1) // m) * m


def _pick_batch_tile(bs, d, per_row_bytes, weight_bytes, *,
                     target_steps=8, max_tb=16, budget=20 * 1024 * 1024):
    """Batch-tile size: multiple of 8 (or full bs), ~target_steps grid steps,
    double-buffered blocks + resident weights within a conservative VMEM budget."""
    if bs <= 8:
        return bs
    tb = min(max_tb, max(8, _round_up(pl.cdiv(bs, target_steps), 8)))
    while tb > 8 and 2 * tb * per_row_bytes + weight_bytes > budget:
        tb -= 8
    if (tb * d) % 128 != 0 and tb < bs:
        # Output block lane dim must be a multiple of 128 or full; fall back to
        # one full-batch block for odd latent_dims (not the production config).
        tb = bs
    return tb


def _normalize_tile(tb, bs, d):
    tb = max(1, min(int(tb), bs))
    if tb < bs:
        tb = max(8, (tb // 8) * 8)
        if (tb * d) % 128 != 0:
            tb = bs
    return tb


# ----------------------------------------------------------------------------
# Pallas wrappers
# ----------------------------------------------------------------------------
def pallas_pose_linear(x3, w, b, *, compute_dtype=None, out_dtype=jnp.float32,
                       batch_tile=None):
    """x3:(bs, F, T) native layout, w:(F, D), b:(D,) -> (T, bs, D)."""
    bs, f, t = x3.shape
    d = w.shape[1]
    w_c = w.astype(compute_dtype) if compute_dtype is not None else w
    b2 = b.reshape(1, d).astype(jnp.float32)

    in_bytes = jnp.dtype(x3.dtype).itemsize
    out_bytes = jnp.dtype(out_dtype).itemsize
    per_row = f * t * in_bytes + t * d * out_bytes
    w_bytes = 2 * (f * d * jnp.dtype(w_c.dtype).itemsize + d * 4)
    if batch_tile is None:
        tb = _pick_batch_tile(bs, d, per_row, w_bytes)
    else:
        tb = _normalize_tile(batch_tile, bs, d)
    grid_b = pl.cdiv(bs, tb)

    out2 = pl.pallas_call(
        functools.partial(_pose_kernel, compute_dtype=compute_dtype),
        out_shape=jax.ShapeDtypeStruct((t, bs * d), out_dtype),
        grid=(grid_b,),
        in_specs=[
            pl.BlockSpec((tb, f, t), lambda i: (i, 0, 0)),   # native x layout
            pl.BlockSpec((f, d), lambda i: (0, 0)),          # W resident
            pl.BlockSpec((1, d), lambda i: (0, 0)),          # bias resident
        ],
        out_specs=pl.BlockSpec((t, tb * d), lambda i: (0, i)),
        compiler_params=pltpu.CompilerParams(
            dimension_semantics=("parallel",),
            vmem_limit_bytes=_VMEM_LIMIT_BYTES),
    )(x3, w_c, b2)
    return out2.reshape(t, bs, d)                        # free metadata reshape


def pallas_rotvel_linear(x3, pose_w, pose_b, vel_w, vel_b, *,
                         compute_dtype=None, out_dtype=jnp.float32,
                         batch_tile=None):
    """rot_vel branch in ONE launch. x3:(bs, F, T) -> (T, bs, D)."""
    bs, f, t = x3.shape
    d = pose_w.shape[1]
    if compute_dtype is not None:
        pose_w = pose_w.astype(compute_dtype)
        vel_w = vel_w.astype(compute_dtype)
    bp = pose_b.reshape(1, d).astype(jnp.float32)
    bv = vel_b.reshape(1, d).astype(jnp.float32)

    in_bytes = jnp.dtype(x3.dtype).itemsize
    out_bytes = jnp.dtype(out_dtype).itemsize
    per_row = f * t * in_bytes + t * d * out_bytes
    w_bytes = 2 * 2 * (f * d * jnp.dtype(pose_w.dtype).itemsize + d * 4)
    if batch_tile is None:
        tb = _pick_batch_tile(bs, d, per_row, w_bytes)
    else:
        tb = _normalize_tile(batch_tile, bs, d)
    grid_b = pl.cdiv(bs, tb)

    out2 = pl.pallas_call(
        functools.partial(_rotvel_kernel, compute_dtype=compute_dtype),
        out_shape=jax.ShapeDtypeStruct((t, bs * d), out_dtype),
        grid=(grid_b,),
        in_specs=[
            pl.BlockSpec((tb, f, t), lambda i: (i, 0, 0)),
            pl.BlockSpec((f, d), lambda i: (0, 0)),          # pose_w resident
            pl.BlockSpec((1, d), lambda i: (0, 0)),          # pose_b resident
            pl.BlockSpec((f, d), lambda i: (0, 0)),          # vel_w resident
            pl.BlockSpec((1, d), lambda i: (0, 0)),          # vel_b resident
        ],
        out_specs=pl.BlockSpec((t, tb * d), lambda i: (0, i)),
        compiler_params=pltpu.CompilerParams(
            dimension_semantics=("parallel",),
            vmem_limit_bytes=_VMEM_LIMIT_BYTES),
    )(x3, pose_w, bp, vel_w, bv)
    return out2.reshape(t, bs, d)


# ----------------------------------------------------------------------------
# InputProcess forward
# ----------------------------------------------------------------------------
def input_process_forward(params, x, *, data_rep, compute_dtype=None,
                          out_dtype=jnp.float32):
    """x: (bs, njoints, nfeats, nframes) -> (nframes, bs, latent_dim)."""
    bs, njoints, nfeats, nframes = x.shape
    # No HBM relayout: merging (njoints, nfeats) is a free metadata reshape;
    # the (frame, batch)-major relayout happens in-VMEM inside the kernel.
    x3 = x.reshape(bs, njoints * nfeats, nframes)

    if data_rep in ("rot6d", "xyz", "hml_vec"):
        return pallas_pose_linear(x3, params["pose_w"], params["pose_b"],
                                  compute_dtype=compute_dtype,
                                  out_dtype=out_dtype)
    elif data_rep == "rot_vel":
        return pallas_rotvel_linear(x3, params["pose_w"], params["pose_b"],
                                    params["vel_w"], params["vel_b"],
                                    compute_dtype=compute_dtype,
                                    out_dtype=out_dtype)
    else:
        raise ValueError(data_rep)


def init_params(key, input_feats, latent_dim, data_rep):
    """Synthetic init mimicking nn.Linear; weights stored (in, out)."""
    keys = jax.random.split(key, 4)
    bound = 1.0 / jnp.sqrt(input_feats)
    params = {
        "pose_w": jax.random.uniform(keys[0], (input_feats, latent_dim),
                                     jnp.float32, -bound, bound),
        "pose_b": jax.random.uniform(keys[1], (latent_dim,),
                                     jnp.float32, -bound, bound),
    }
    if data_rep == "rot_vel":
        params["vel_w"] = jax.random.uniform(keys[2], (input_feats, latent_dim),
                                             jnp.float32, -bound, bound),
        # (keep as array, not tuple)
        params["vel_w"] = params["vel_w"][0]
        params["vel_b"] = jax.random.uniform(keys[3], (latent_dim,),
                                             jnp.float32, -bound, bound)
    return params


if __name__ == "__main__":
    key = jax.random.PRNGKey(0)
    k_x, k_p, k_x2 = jax.random.split(key, 3)

    # --- small shapes consistent with the module ------------------------------
    bs, njoints, nfeats, nframes = 2, 4, 4, 8
    input_feats = njoints * nfeats          # 16
    latent_dim = 32

    x = jax.random.normal(k_x, (bs, njoints, nfeats, nframes), jnp.float32)
    params = init_params(k_p, input_feats, latent_dim, "rot6d")
    params_rv = init_params(k_p, input_feats, latent_dim, "rot_vel")

    fwd = jax.jit(input_process_forward,
                  static_argnames=("data_rep", "compute_dtype", "out_dtype"))

    # pure-JAX references (exact torch-module semantics)
    x_t = jnp.transpose(x, (3, 0, 1, 2)).reshape(nframes, bs, input_feats)
    ref_pose = x_t @ params["pose_w"] + params["pose_b"]
    ref_rv = jnp.concatenate(
        (x_t[:1] @ params_rv["pose_w"] + params_rv["pose_b"],
         x_t[1:] @ params_rv["vel_w"] + params_rv["vel_b"]), axis=0)

    # f32 path (exact semantics of the torch module)
    out = jax.block_until_ready(fwd(params, x, data_rep="rot6d"))
    assert out.shape == (nframes, bs, latent_dim), out.shape
    assert jnp.allclose(out, ref_pose, atol=1e-5, rtol=1e-5)

    out_rv = jax.block_until_ready(fwd(params_rv, x, data_rep="rot_vel"))
    assert out_rv.shape == (nframes, bs, latent_dim)
    assert jnp.allclose(out_rv, ref_rv, atol=1e-5, rtol=1e-5)

    # bf16 compute (weights + in-VMEM x cast), f32 accumulation, f32 output
    out_bf = jax.block_until_ready(
        fwd(params, x, data_rep="rot6d", compute_dtype=jnp.bfloat16))
    assert jnp.allclose(out_bf, ref_pose, atol=5e-2, rtol=5e-2)

    # bf16 output store (halves the dominant output HBM-write traffic)
    out_bo = jax.block_until_ready(
        fwd(params, x, data_rep="rot6d", out_dtype=jnp.bfloat16))
    assert out_bo.dtype == jnp.bfloat16
    assert jnp.allclose(out_bo.astype(jnp.float32), ref_pose,
                        atol=5e-2, rtol=5e-2)

    # --- multi-step grid + partial last batch block (bs=12 -> tb=8, 2 steps) --
    bs2, nframes2 = 12, 40
    x2 = jax.random.normal(k_x2, (bs2, njoints, nfeats, nframes2), jnp.float32)
    x2_t = jnp.transpose(x2, (3, 0, 1, 2)).reshape(nframes2, bs2, input_feats)
    ref2_pose = x2_t @ params["pose_w"] + params["pose_b"]
    ref2_rv = jnp.concatenate(
        (x2_t[:1] @ params_rv["pose_w"] + params_rv["pose_b"],
         x2_t[1:] @ params_rv["vel_w"] + params_rv["vel_b"]), axis=0)

    out2 = jax.block_until_ready(fwd(params, x2, data_rep="rot6d"))
    assert out2.shape == (nframes2, bs2, latent_dim)
    assert jnp.allclose(out2, ref2_pose, atol=1e-5, rtol=1e-5)

    out2_rv = jax.block_until_ready(fwd(params_rv, x2, data_rep="rot_vel"))
    assert jnp.allclose(out2_rv, ref2_rv, atol=1e-5, rtol=1e-5)

    print("KERNEL_OK")
</pallas_src>

<mosaic_0001>
module attributes {stable_mosaic.version = 11 : i64} {
  func.func @_pose_kernel(%arg0: i32, %arg1: memref<2x16x8xf32, #tpu.memory_space<vmem>>, %arg2: memref<16x32xf32, #tpu.memory_space<vmem>>, %arg3: memref<1x32xf32, #tpu.memory_space<vmem>>, %arg4: memref<8x64xf32, #tpu.memory_space<vmem>>) attributes {dimension_semantics = [#tpu.dimension_semantics<parallel>], iteration_bounds = array<i64: 1>, scalar_prefetch = 0 : i64, scratch_operands = 0 : i64, tpu.core_type = #tpu.core_type<tc>, window_params = [{transform_indices = @transform_0, window_bounds = array<i64: 2, 16, 8>}, {pipeline_mode = #tpu.pipeline_mode<synchronous>, transform_indices = @transform_1, window_bounds = array<i64: 16, 32>}, {pipeline_mode = #tpu.pipeline_mode<synchronous>, transform_indices = @transform_2, window_bounds = array<i64: 1, 32>}, {transform_indices = @transform_3, window_bounds = array<i64: 8, 64>}]} {
    %c0 = arith.constant 0 : index
    %c0_0 = arith.constant 0 : index
    %0 = vector.load %arg2[%c0, %c0_0] : memref<16x32xf32, #tpu.memory_space<vmem>>, vector<16x32xf32>
    %c0_1 = arith.constant 0 : index
    %c0_2 = arith.constant 0 : index
    %1 = vector.load %arg3[%c0_1, %c0_2] : memref<1x32xf32, #tpu.memory_space<vmem>>, vector<1x32xf32>
    %c0_3 = arith.constant 0 : index
    %c0_4 = arith.constant 0 : index
    %c0_5 = arith.constant 0 : index
    %2 = vector.load %arg1[%c0_3, %c0_4, %c0_5] : memref<2x16x8xf32, #tpu.memory_space<vmem>>, vector<1x16x8xf32>
    %3 = vector.shape_cast %2 : vector<1x16x8xf32> to vector<16x8xf32>
    %4 = tpu.transpose %3, [1, 0] : vector<16x8xf32> -> vector<8x16xf32>
    %cst = arith.constant dense<0.000000e+00> : vector<8x32xf32>
    %5 = tpu.matmul %4, %0, %cst {dimension_numbers = #tpu.dot_dimension_numbers<[1], [0], [0], [1], [0, 0, 1, 1], [], []>} : vector<8x16xf32>, vector<16x32xf32>, vector<8x32xf32> -> vector<8x32xf32>
    %6 = vector.broadcast %1 : vector<1x32xf32> to vector<8x32xf32>
    %7 = arith.addf %5, %6 : vector<8x32xf32>
    %c0_6 = arith.constant 0 : index
    %c0_7 = arith.constant 0 : index
    %8 = vector.load %arg4[%c0_6, %c0_7] : memref<8x64xf32, #tpu.memory_space<vmem>>, vector<8x32xf32>
    tpu.vector_store %arg4[%c0_6, %c0_7], %7 {strides = array<i32>} : memref<8x64xf32, #tpu.memory_space<vmem>>, vector<8x32xf32>,
    %c1 = arith.constant 1 : index
    %c0_8 = arith.constant 0 : index
    %c0_9 = arith.constant 0 : index
    %9 = vector.load %arg1[%c1, %c0_8, %c0_9] : memref<2x16x8xf32, #tpu.memory_space<vmem>>, vector<1x16x8xf32>
    %10 = vector.shape_cast %9 : vector<1x16x8xf32> to vector<16x8xf32>
    %11 = tpu.transpose %10, [1, 0] : vector<16x8xf32> -> vector<8x16xf32>
    %cst_10 = arith.constant dense<0.000000e+00> : vector<8x32xf32>
    %12 = tpu.matmul %11, %0, %cst_10 {dimension_numbers = #tpu.dot_dimension_numbers<[1], [0], [0], [1], [0, 0, 1, 1], [], []>} : vector<8x16xf32>, vector<16x32xf32>, vector<8x32xf32> -> vector<8x32xf32>
    %13 = vector.broadcast %1 : vector<1x32xf32> to vector<8x32xf32>
    %14 = arith.addf %12, %13 : vector<8x32xf32>
    %c0_11 = arith.constant 0 : index
    %c32 = arith.constant 32 : index
    %15 = vector.load %arg4[%c0_11, %c32] : memref<8x64xf32, #tpu.memory_space<vmem>>, vector<8x32xf32>
    tpu.vector_store %arg4[%c0_11, %c32], %14 {strides = array<i32>} : memref<8x64xf32, #tpu.memory_space<vmem>>, vector<8x32xf32>,
    return
  }
  func.func @transform_0(%arg0: i32) -> (i32, i32, i32) {
    %c0_i32 = arith.constant 0 : i32
    %c0_i32_0 = arith.constant 0 : i32
    %c0_i32_1 = arith.constant 0 : i32
    return %arg0, %c0_i32, %c0_i32_0 : i32, i32, i32
  }
  func.func @transform_1(%arg0: i32) -> (i32, i32) {
    %c0_i32 = arith.constant 0 : i32
    %c0_i32_0 = arith.constant 0 : i32
    %c0_i32_1 = arith.constant 0 : i32
    return %c0_i32, %c0_i32_0 : i32, i32
  }
  func.func @transform_2(%arg0: i32) -> (i32, i32) {
    %c0_i32 = arith.constant 0 : i32
    %c0_i32_0 = arith.constant 0 : i32
    %c0_i32_1 = arith.constant 0 : i32
    return %c0_i32, %c0_i32_0 : i32, i32
  }
  func.func @transform_3(%arg0: i32) -> (i32, i32) {
    %c0_i32 = arith.constant 0 : i32
    %c0_i32_0 = arith.constant 0 : i32
    return %c0_i32, %arg0 : i32, i32
  }
}

</mosaic_0001>

<llo_original>
// kernel: input_process_forward.1
$region0: #{input_process_forward.1}
  #allocation0 [shape = 'u32[]', space=smem, size = 0x4, offset = 0x4, fixed_abs, tag = 'smem constant byte address 0x4 - core index']
  #allocation1 [shape = 'u32[144,128]{1,0:T(1,128)}', space=vmem, size = 0x12000, scoped, tag = 'internal scratch']
  %s0 = inlined_call_operand.hbm [shape: f32[2,16,8], index: 0, kind: input, shape index: {}]
  %s1 = inlined_call_operand.hbm [shape: f32[16,32], index: 1, kind: input, shape index: {}]
  %s2 = inlined_call_operand.vmem [shape: f32[1,32], index: 2, kind: input, shape index: {}]
  %s3 = inlined_call_operand.vmem [shape: f32[8,64], index: 3, kind: output, shape index: {}]
  %s4 = sld [smem:[#allocation0]]
  $region30: #{input_process_forward.1} parent=0
    _
  %s6 = ssub.s32 1, %s4
  %s7 = scalar_select 0, %s6, %s4
  $region1: #{input_process_forward.1} parent=0
    #allocation2 [shape = 'u8[16384]{0}', space=vmem, size = 0x4000, scoped, tag = 'input window, operand 0, single buffered']
    #allocation3 [shape = 's32[1]{0}', space=sflag, size = 0x4, scoped, tag = 'scoped memory for input_process_forward.1']
    #allocation4 [shape = 'u8[8192]{0}', space=vmem, size = 0x2000, scoped, tag = 'input window, operand 1, single buffered']
    #allocation5 [shape = 's32[1]{0}', space=sflag, size = 0x4, scoped, tag = 'scoped memory for input_process_forward.1']
    %8 = vsyncpa [#allocation3], 0
    %9 = vsyncpa [#allocation5], 0
    // Predicated region
    $region2: #{input_process_forward.1} parent=1 // pred_check
      _
    $region3: #{input_process_forward.1} parent=1 // pred_check_branch
      %11 = sbr.rel (0) target = $region5
    $region4: #{input_process_forward.1} parent=1 // pred_region
      %s13 = ssub.s32 512, 512
      %14 = vsyncadd [#allocation3], %s13
      %s15 = sshll.u32 [#allocation2], 4
      %s16 = int_to_ptr.vmem [resolvable:$true] %s15
      %21 = dma.hbm_to_vmem [thread:$0]  %s0, 512, %s16, [#allocation3], 128, 128, 8
    $region5: #{input_process_forward.1} parent=1 // pred_fallthru
      _
    // Predicated region
    $region6: #{input_process_forward.1} parent=1 // pred_check
      _
    $region7: #{input_process_forward.1} parent=1 // pred_check_branch
      %23 = sbr.rel (0) target = $region9
    $region8: #{input_process_forward.1} parent=1 // pred_region
      %s25 = ssub.s32 256, 256
      %26 = vsyncadd [#allocation5], %s25
      %s27 = sshll.u32 [#allocation4], 4
      %s28 = int_to_ptr.vmem [resolvable:$true] %s27
      %33 = dma.hbm_to_vmem [thread:$0]  %s1, 256, %s28, [#allocation5], 128, 128, 8
    $region9: #{input_process_forward.1} parent=1 // pred_fallthru
      _
    // Predicated region
    $region10: #{input_process_forward.1} parent=1 // pred_check
      _
    $region11: #{input_process_forward.1} parent=1 // pred_check_branch
      %35 = sbr.rel (0) target = $region13
    $region12: #{input_process_forward.1} parent=1 // pred_region
      _
    $region13: #{input_process_forward.1} parent=1 // pred_fallthru
      _
    // Predicated region
    $region14: #{input_process_forward.1} parent=1 // pred_check
      _
    $region15: #{input_process_forward.1} parent=1 // pred_check_branch
      %37 = sbr.rel (0) target = $region17
    $region16: #{input_process_forward.1} parent=1 // pred_region
      %38 = dma.done [#allocation3], 512
    $region17: #{input_process_forward.1} parent=1 // pred_fallthru
      _
    // Predicated region
    $region18: #{input_process_forward.1} parent=1 // pred_check
      _
    $region19: #{input_process_forward.1} parent=1 // pred_check_branch
      %40 = sbr.rel (0) target = $region21
    $region20: #{input_process_forward.1} parent=1 // pred_region
      %41 = dma.done [#allocation5], 256
    $region21: #{input_process_forward.1} parent=1 // pred_fallthru
      _
    %v42 = vld [vmem:[#allocation4] sm:$0xff]
    %v43 = vld [vmem:[#allocation4 + $0x8] sm:$0xff]
    %v44 = vld [vmem:[%s2] sm:$0x1]
    %v45 = vld [vmem:[#allocation2] sm:$0xff]
    %v46 = vld [vmem:[#allocation2 + $0x8] sm:$0xff]
    %47 = vxpose.xlu0.b32.start [1/16] %v45, 128
    %48 = vxpose.xlu0.b32.cont [2/16] %v46, 128
    %49 = vxpose.xlu0.b32.cont [3/16] 0.0, 128
    %50 = vxpose.xlu0.b32.cont [4/16] 0.0, 128
    %51 = vxpose.xlu0.b32.cont [5/16] 0.0, 128
    %52 = vxpose.xlu0.b32.cont [6/16] 0.0, 128
    %53 = vxpose.xlu0.b32.cont [7/16] 0.0, 128
    %54 = vxpose.xlu0.b32.cont [8/16] 0.0, 128
    %55 = vxpose.xlu0.b32.cont [9/16] 0.0, 128
    %56 = vxpose.xlu0.b32.cont [10/16] 0.0, 128
    %57 = vxpose.xlu0.b32.cont [11/16] 0.0, 128
    %58 = vxpose.xlu0.b32.cont [12/16] 0.0, 128
    %59 = vxpose.xlu0.b32.cont [13/16] 0.0, 128
    %60 = vxpose.xlu0.b32.cont [14/16] 0.0, 128
    %61 = vxpose.xlu0.b32.cont [15/16] 0.0, 128
    %62 = vxpose.xlu0.b32.end [16/16] 0.0, 128
    %v63 = vpop.trf.xlu0
    %v64 = vpop.trf.xlu0
    %v65 = vpop.trf.xlu0
    %v66 = vpop.trf.xlu0
    %v67 = vpop.trf.xlu0
    %v68 = vpop.trf.xlu0
    %v69 = vpop.trf.xlu0
    %v70 = vpop.trf.xlu0
    %v71 = vpop.trf.xlu0
    %v72 = vpop.trf.xlu0
    %v73 = vpop.trf.xlu0
    %v74 = vpop.trf.xlu0
    %v75 = vpop.trf.xlu0
    %v76 = vpop.trf.xlu0
    %v77 = vpop.trf.xlu0
    %v78 = vpop.trf.xlu0
    %v80 = vlaneseq
    %v81 = vshrl.u32 %v80, 7
    %v82 = vsub.s32 0, %v81
    %v83 = vrot.slane %v44, %v82
    %vm85 = vcmask 130048
    %v87 = vsel %vm85, %v63, 0
    %89 = vmatprep.subr.mxu0 0.0
    %90 = vmatpush1.msra.mxu0 0.0
    %91 = vmatprep.subr.mxu0 0.0
    %92 = vmatpush1.msra.mxu0 0.0
    %93 = vmatprep.subr.mxu0 0.0
    %94 = vmatpush1.msra.mxu0 0.0
    %95 = vmatprep.subr.mxu0 0.0
    %96 = vmatpush1.msra.mxu0 0.0
    %97 = vmatprep.subr.mxu0 0.0
    %98 = vmatpush1.msra.mxu0 0.0
    %99 = vmatprep.subr.mxu0 0.0
    %100 = vmatpush1.msra.mxu0 0.0
    %101 = vmatprep.subr.mxu0 0.0
    %102 = vmatpush1.msra.mxu0 0.0
    %103 = vmatprep.subr.mxu0 0.0
    %104 = vmatpush1.msra.mxu0 0.0
    %105 = vmatprep.subr.mxu0 0.0
    %106 = vmatpush1.msra.mxu0 0.0
    %107 = vmatprep.subr.mxu0 0.0
    %108 = vmatpush1.msra.mxu0 0.0
    %109 = vmatprep.subr.mxu0 0.0
    %110 = vmatpush1.msra.mxu0 0.0
    %111 = vmatprep.subr.mxu0 0.0
    %112 = vmatpush1.msra.mxu0 0.0
    %113 = vmatprep.subr.mxu0 0.0
    %114 = vmatpush1.msra.mxu0 0.0
    %115 = vmatprep.subr.mxu0 0.0
    %116 = vmatpush1.msra.mxu0 0.0
    %117 = vmatprep.subr.mxu0 0.0
    %118 = vmatpush1.msra.mxu0 %v43
    %119 = vmatprep.subr.mxu0 0.0
    %120 = vmatpush1.msra.mxu0 %v42
    %121 = vmatprep.subr.mxu0 0.0
    %122 = vmatpush2.msra.mxu0 0.0
    %123 = vmatprep.subr.mxu0 0.0
    %124 = vmatpush2.msra.mxu0 0.0
    %125 = vmatprep.subr.mxu0 0.0
    %126 = vmatpush2.msra.mxu0 0.0
    %127 = vmatprep.subr.mxu0 0.0
    %128 = vmatpush2.msra.mxu0 0.0
    %129 = vmatprep.subr.mxu0 0.0
    %130 = vmatpush2.msra.mxu0 0.0
    %131 = vmatprep.subr.mxu0 0.0
    %132 = vmatpush2.msra.mxu0 0.0
    %133 = vmatprep.subr.mxu0 0.0
    %134 = vmatpush2.msra.mxu0 0.0
    %135 = vmatprep.subr.mxu0 0.0
    %136 = vmatpush2.msra.mxu0 0.0
    %137 = vmatprep.subr.mxu0 0.0
    %138 = vmatpush2.msra.mxu0 0.0
    %139 = vmatprep.subr.mxu0 0.0
    %140 = vmatpush2.msra.mxu0 0.0
    %141 = vmatprep.subr.mxu0 0.0
    %142 = vmatpush2.msra.mxu0 0.0
    %143 = vmatprep.subr.mxu0 0.0
    %144 = vmatpush2.msra.mxu0 0.0
    %145 = vmatprep.subr.mxu0 0.0
    %146 = vmatpush2.msra.mxu0 0.0
    %147 = vmatprep.subr.mxu0 0.0
    %148 = vmatpush2.msra.mxu0 0.0
    %149 = vmatprep.subr.mxu0 0.0
    %150 = vmatpush2.msra.mxu0 0.0
    %151 = vmatprep.subr.mxu0 0.0
    %152 = vmatpush2.msra.mxu0 0.0
    %153 = vmatprep.mubr.f32.mxu0 0.0
    %154 = vmatmul.mubr.f32.gmra.mxu0 %v87
    %v155 = vpop.f32.mrf.mxu0
    %v156 = vadd.f32 %v83, %v155
    %v157 = vpop.f32.mrf.mxu0
    %158 = vdwg.mxu0
    %vm159 = vcmask 261120
    %160 = vst.msk [vmem:[%s3] sm:$0xff] %vm159, %v156
    %s161 = scalar_lea.vmem [#allocation2], 16
    %v162 = vld [vmem:[%s161] sm:$0xff]
    %v163 = vld [vmem:[%s161 + $0x8] sm:$0xff]
    %164 = vxpose.xlu0.b32.start [1/16] %v162, 128
    %165 = vxpose.xlu0.b32.cont [2/16] %v163, 128
    %166 = vxpose.xlu0.b32.cont [3/16] 0.0, 128
    %167 = vxpose.xlu0.b32.cont [4/16] 0.0, 128
    %168 = vxpose.xlu0.b32.cont [5/16] 0.0, 128
    %169 = vxpose.xlu0.b32.cont [6/16] 0.0, 128
    %170 = vxpose.xlu0.b32.cont [7/16] 0.0, 128
    %171 = vxpose.xlu0.b32.cont [8/16] 0.0, 128
    %172 = vxpose.xlu0.b32.cont [9/16] 0.0, 128
    %173 = vxpose.xlu0.b32.cont [10/16] 0.0, 128
    %174 = vxpose.xlu0.b32.cont [11/16] 0.0, 128
    %175 = vxpose.xlu0.b32.cont [12/16] 0.0, 128
    %176 = vxpose.xlu0.b32.cont [13/16] 0.0, 128
    %177 = vxpose.xlu0.b32.cont [14/16] 0.0, 128
    %178 = vxpose.xlu0.b32.cont [15/16] 0.0, 128
    %179 = vxpose.xlu0.b32.end [16/16] 0.0, 128
    %v180 = vpop.trf.xlu0
    %v181 = vpop.trf.xlu0
    %v182 = vpop.trf.xlu0
    %v183 = vpop.trf.xlu0
    %v184 = vpop.trf.xlu0
    %v185 = vpop.trf.xlu0
    %v186 = vpop.trf.xlu0
    %v187 = vpop.trf.xlu0
    %v188 = vpop.trf.xlu0
    %v189 = vpop.trf.xlu0
    %v190 = vpop.trf.xlu0
    %v191 = vpop.trf.xlu0
    %v192 = vpop.trf.xlu0
    %v193 = vpop.trf.xlu0
    %v194 = vpop.trf.xlu0
    %v195 = vpop.trf.xlu0
    %v197 = vsel %vm85, %v180, 0
    %199 = vmatprep.subr.mxu0 0.0
    %200 = vmatpush1.msra.mxu0 0.0
    %201 = vmatprep.subr.mxu0 0.0
    %202 = vmatpush1.msra.mxu0 0.0
    %203 = vmatprep.subr.mxu0 0.0
    %204 = vmatpush1.msra.mxu0 0.0
    %205 = vmatprep.subr.mxu0 0.0
    %206 = vmatpush1.msra.mxu0 0.0
    %207 = vmatprep.subr.mxu0 0.0
    %208 = vmatpush1.msra.mxu0 0.0
    %209 = vmatprep.subr.mxu0 0.0
    %210 = vmatpush1.msra.mxu0 0.0
    %211 = vmatprep.subr.mxu0 0.0
    %212 = vmatpush1.msra.mxu0 0.0
    %213 = vmatprep.subr.mxu0 0.0
    %214 = vmatpush1.msra.mxu0 0.0
    %215 = vmatprep.subr.mxu0 0.0
    %216 = vmatpush1.msra.mxu0 0.0
    %217 = vmatprep.subr.mxu0 0.0
    %218 = vmatpush1.msra.mxu0 0.0
    %219 = vmatprep.subr.mxu0 0.0
    %220 = vmatpush1.msra.mxu0 0.0
    %221 = vmatprep.subr.mxu0 0.0
    %222 = vmatpush1.msra.mxu0 0.0
    %223 = vmatprep.subr.mxu0 0.0
    %224 = vmatpush1.msra.mxu0 0.0
    %225 = vmatprep.subr.mxu0 0.0
    %226 = vmatpush1.msra.mxu0 0.0
    %227 = vmatprep.subr.mxu0 0.0
    %228 = vmatpush1.msra.mxu0 %v43
    %229 = vmatprep.subr.mxu0 0.0
    %230 = vmatpush1.msra.mxu0 %v42
    %231 = vmatprep.subr.mxu0 0.0
    %232 = vmatpush2.msra.mxu0 0.0
    %233 = vmatprep.subr.mxu0 0.0
    %234 = vmatpush2.msra.mxu0 0.0
    %235 = vmatprep.subr.mxu0 0.0
    %236 = vmatpush2.msra.mxu0 0.0
    %237 = vmatprep.subr.mxu0 0.0
    %238 = vmatpush2.msra.mxu0 0.0
    %239 = vmatprep.subr.mxu0 0.0
    %240 = vmatpush2.msra.mxu0 0.0
    %241 = vmatprep.subr.mxu0 0.0
    %242 = vmatpush2.msra.mxu0 0.0
    %243 = vmatprep.subr.mxu0 0.0
    %244 = vmatpush2.msra.mxu0 0.0
    %245 = vmatprep.subr.mxu0 0.0
    %246 = vmatpush2.msra.mxu0 0.0
    %247 = vmatprep.subr.mxu0 0.0
    %248 = vmatpush2.msra.mxu0 0.0
    %249 = vmatprep.subr.mxu0 0.0
    %250 = vmatpush2.msra.mxu0 0.0
    %251 = vmatprep.subr.mxu0 0.0
    %252 = vmatpush2.msra.mxu0 0.0
    %253 = vmatprep.subr.mxu0 0.0
    %254 = vmatpush2.msra.mxu0 0.0
    %255 = vmatprep.subr.mxu0 0.0
    %256 = vmatpush2.msra.mxu0 0.0
    %257 = vmatprep.subr.mxu0 0.0
    %258 = vmatpush2.msra.mxu0 0.0
    %259 = vmatprep.subr.mxu0 0.0
    %260 = vmatpush2.msra.mxu0 0.0
    %261 = vmatprep.subr.mxu0 0.0
    %262 = vmatpush2.msra.mxu0 0.0
    %263 = vmatprep.mubr.f32.mxu0 0.0
    %264 = vmatmul.mubr.f32.gmra.mxu0 %v197
    %v265 = vpop.f32.mrf.mxu0
    %v266 = vadd.f32 %v83, %v265
    %v267 = vpop.f32.mrf.mxu0
    %268 = vdwg.mxu0
    %270 = vrot.lane.b32.xlu0 %v266, 32
    %v271 = vpop.permute.xlu0 %270
    %vm273 = vcmask 523520
    %274 = vst.msk [vmem:[%s3] sm:$0xff] %vm273, %v271
    // Predicated region
    $region22: #{input_process_forward.1} parent=1 // pred_check
      _
    $region23: #{input_process_forward.1} parent=1 // pred_check_branch
      %276 = sbr.rel (0) target = $region25
    $region24: #{input_process_forward.1} parent=1 // pred_region
      _
    $region25: #{input_process_forward.1} parent=1 // pred_fallthru
      _
    // Predicated region
    $region26: #{input_process_forward.1} parent=1 // pred_check
      _
    $region27: #{input_process_forward.1} parent=1 // pred_check_branch
      %278 = sbr.rel (0) target = $region29
    $region28: #{input_process_forward.1} parent=1 // pred_region
      _
    $region29: #{input_process_forward.1} parent=1 // pred_fallthru
      _
    %279 = vsyncpa [#allocation3], 1
    %280 = vsyncpa [#allocation5], 1

</llo_original>
